<compile_context>
chip_gen: v5e
topology: v5e:2x2
jax: 0.10.0
libtpu: 0.0.40
codegen_flags: <defaults>
</compile_context>

<pallas_src>
import jax
import jax.numpy as jnp
from jax.experimental import pallas as pl
from jax.experimental.pallas import tpu as pltpu


def _attention_kernel(k_ref, v_ref, q_ref, o_ref):
    # k_ref: (TB, Sk, Fk) ; v_ref: (TB, Sk, Fv) ; q_ref: (TB, tq, Fk) ; o_ref: (TB, tq, Fv)
    k = k_ref[...]
    v = v_ref[...]
    q = q_ref[...]

    # scores[b, q, k] = query[b,q,:] . key[b,k,:]  (contraction over F, no transposes)
    scores = jnp.einsum("bqf,bkf->bqk", q, k, preferred_element_type=jnp.float32)

    # softmax over the KEY axis (last / lane axis here) == torch softmax(dim=1) of (B, Sk, Sq)
    m = jnp.max(scores, axis=-1, keepdims=True)
    e = jnp.exp(scores - m)
    denom = jnp.sum(e, axis=-1, keepdims=True)
    p = e * pl.reciprocal(denom, approx=False)          # f32 probabilities, (TB, tq, Sk)

    # out[b, q, f] = sum_k p[b, q, k] * value[b, k, f]
    out = jnp.einsum("bqk,bkf->bqf", p.astype(v.dtype), v,
                     preferred_element_type=jnp.float32)
    o_ref[...] = out.astype(o_ref.dtype)


def _largest_divisor_leq(n, cap):
    cap = max(1, min(n, int(cap)))
    for d in range(cap, 0, -1):
        if n % d == 0:
            return d
    return 1


def _pick_q_block(sq, cap=512):
    # Full Sq if small; otherwise the largest sublane-aligned divisor <= cap.
    if sq <= cap:
        return sq
    for t in range(cap, 7, -1):
        if sq % t == 0 and t % 8 == 0:
            return t
    return sq  # fallback: no Sq tiling


def net_attention(key_seq, value_seq, query_seq):
    """key_seq: [B, Sk, Fk]; value_seq: [B, Sk, Fv]; query_seq: [B, Sq, Fk] -> [B, Sq, Fv]."""
    B, Sk, Fk = key_seq.shape
    _, _, Fv = value_seq.shape
    _, Sq, _ = query_seq.shape

    itemsize = jnp.dtype(key_seq.dtype).itemsize
    tq = _pick_q_block(Sq)

    # Per-batch working-set estimate for one grid step (operands + f32 score intermediates);
    # target a few MiB so double-buffering stays well under the default scoped VMEM limit.
    per_batch_bytes = ((Sk * Fk + Sk * Fv) * itemsize          # key + value
                       + (tq * Fk + tq * Fv) * itemsize        # query tile + out tile
                       + 3 * tq * Sk * 4)                      # scores / exp / probs (f32)
    tb = _largest_divisor_leq(B, max(1, (4 * 1024 * 1024) // max(per_batch_bytes, 1)))

    grid = (B // tb, Sq // tq)

    cost = pl.CostEstimate(
        flops=2 * B * Sq * Sk * Fk + 2 * B * Sq * Sk * Fv,
        transcendentals=B * Sq * Sk,
        bytes_accessed=(key_seq.size + value_seq.size + query_seq.size) * itemsize
                       + B * Sq * Fv * jnp.dtype(value_seq.dtype).itemsize,
    )

    return pl.pallas_call(
        _attention_kernel,
        out_shape=jax.ShapeDtypeStruct((B, Sq, Fv), value_seq.dtype),
        grid_spec=pltpu.PrefetchScalarGridSpec(
            num_scalar_prefetch=0,
            grid=grid,
            in_specs=[
                pl.BlockSpec((tb, Sk, Fk), lambda b, qi: (b, 0, 0)),   # key   (full Sk)
                pl.BlockSpec((tb, Sk, Fv), lambda b, qi: (b, 0, 0)),   # value (full Sk)
                pl.BlockSpec((tb, tq, Fk), lambda b, qi: (b, qi, 0)),  # query (Sq tile)
            ],
            out_specs=pl.BlockSpec((tb, tq, Fv), lambda b, qi: (b, qi, 0)),
        ),
        compiler_params=pltpu.CompilerParams(
            # Both axes are independent (no cross-step accumulator): parallel for
            # megacore sharding (matters on v7x's 2 TensorCores).
            dimension_semantics=("parallel", "parallel"),
        ),
        cost_estimate=cost,
    )(key_seq, value_seq, query_seq)


def _reference(key_seq, value_seq, query_seq):
    # pure-JAX reference mirroring the torch code
    alpha = jnp.einsum("bkf,bqf->bkq", key_seq, query_seq)
    alpha = jax.nn.softmax(alpha, axis=1)
    return jnp.einsum("bkq,bkf->bqf", alpha, value_seq)


if __name__ == "__main__":
    # Module has no learnable parameters, so only inputs.
    B, S, F = 2, 8, 32
    key = jax.random.PRNGKey(0)
    k1, k2, k3 = jax.random.split(key, 3)
    key_seq = jax.random.normal(k1, (B, S, F), dtype=jnp.float32)
    value_seq = jax.random.normal(k2, (B, S, F), dtype=jnp.float32)
    query_seq = jax.random.normal(k3, (B, S, F), dtype=jnp.float32)

    out = net_attention(key_seq, value_seq, query_seq)
    out = jax.block_until_ready(out)

    ref = _reference(key_seq, value_seq, query_seq)
    assert out.shape == (B, S, F)
    assert jnp.allclose(out, ref, atol=1e-5, rtol=1e-5)

    print("KERNEL_OK")
</pallas_src>

<mosaic_0001>
module attributes {stable_mosaic.version = 11 : i64} {
  func.func @_attention_kernel(%arg0: i32, %arg1: i32, %arg2: memref<2x8x32xf32, #tpu.memory_space<vmem>>, %arg3: memref<2x8x32xf32, #tpu.memory_space<vmem>>, %arg4: memref<2x8x32xf32, #tpu.memory_space<vmem>>, %arg5: memref<2x8x32xf32, #tpu.memory_space<vmem>>) attributes {dimension_semantics = [#tpu.dimension_semantics<parallel>, #tpu.dimension_semantics<parallel>], iteration_bounds = array<i64: 1, 1>, scalar_prefetch = 0 : i64, scratch_operands = 0 : i64, tpu.core_type = #tpu.core_type<tc>, window_params = [{transform_indices = @transform_0, window_bounds = array<i64: 2, 8, 32>}, {transform_indices = @transform_1, window_bounds = array<i64: 2, 8, 32>}, {transform_indices = @transform_2, window_bounds = array<i64: 2, 8, 32>}, {transform_indices = @transform_3, window_bounds = array<i64: 2, 8, 32>}]} {
    %c0 = arith.constant 0 : index
    %c0_0 = arith.constant 0 : index
    %c0_1 = arith.constant 0 : index
    %0 = vector.load %arg2[%c0, %c0_0, %c0_1] : memref<2x8x32xf32, #tpu.memory_space<vmem>>, vector<2x8x32xf32>
    %c0_2 = arith.constant 0 : index
    %c0_3 = arith.constant 0 : index
    %c0_4 = arith.constant 0 : index
    %1 = vector.load %arg3[%c0_2, %c0_3, %c0_4] : memref<2x8x32xf32, #tpu.memory_space<vmem>>, vector<2x8x32xf32>
    %c0_5 = arith.constant 0 : index
    %c0_6 = arith.constant 0 : index
    %c0_7 = arith.constant 0 : index
    %2 = vector.load %arg4[%c0_5, %c0_6, %c0_7] : memref<2x8x32xf32, #tpu.memory_space<vmem>>, vector<2x8x32xf32>
    "tpu.trace_start"() <{level = 10 : i32, message = "bqf,bkf->bqk"}> : () -> ()
    %cst = arith.constant dense<0.000000e+00> : vector<2x8x8xf32>
    %3 = tpu.matmul %2, %0, %cst {dimension_numbers = #tpu.dot_dimension_numbers<[2], [2], [1], [1], [0, 0, 0, 1, 1, 1], [0], [0]>} : vector<2x8x32xf32>, vector<2x8x32xf32>, vector<2x8x8xf32> -> vector<2x8x8xf32>
    "tpu.trace_stop"() : () -> ()
    %cst_8 = arith.constant dense<0xFF800000> : vector<2x8xf32>
    %4 = vector.multi_reduction <maximumf>, %3, %cst_8 [2] : vector<2x8x8xf32> to vector<2x8xf32>
    %5 = vector.shape_cast %4 : vector<2x8xf32> to vector<2x8x1xf32>
    %6 = vector.broadcast %5 : vector<2x8x1xf32> to vector<2x8x8xf32>
    %7 = arith.subf %3, %6 : vector<2x8x8xf32>
    %8 = math.exp %7 : vector<2x8x8xf32>
    %cst_9 = arith.constant dense<0.000000e+00> : vector<2x8xf32>
    %9 = vector.multi_reduction <add>, %8, %cst_9 [2] : vector<2x8x8xf32> to vector<2x8xf32>
    %10 = vector.shape_cast %9 : vector<2x8xf32> to vector<2x8x1xf32>
    %11 = tpu.reciprocal %10 : vector<2x8x1xf32> -> vector<2x8x1xf32>
    %12 = vector.broadcast %11 : vector<2x8x1xf32> to vector<2x8x8xf32>
    %13 = arith.mulf %8, %12 : vector<2x8x8xf32>
    "tpu.trace_start"() <{level = 10 : i32, message = "bqk,bkf->bqf"}> : () -> ()
    %cst_10 = arith.constant dense<0.000000e+00> : vector<2x8x32xf32>
    %14 = tpu.matmul %13, %1, %cst_10 {dimension_numbers = #tpu.dot_dimension_numbers<[2], [1], [1], [2], [0, 0, 0, 1, 1, 2], [0], [0]>} : vector<2x8x8xf32>, vector<2x8x32xf32>, vector<2x8x32xf32> -> vector<2x8x32xf32>
    "tpu.trace_stop"() : () -> ()
    %c0_11 = arith.constant 0 : index
    %c0_12 = arith.constant 0 : index
    %c0_13 = arith.constant 0 : index
    %15 = vector.load %arg5[%c0_11, %c0_12, %c0_13] : memref<2x8x32xf32, #tpu.memory_space<vmem>>, vector<2x8x32xf32>
    tpu.vector_store %arg5[%c0_11, %c0_12, %c0_13], %14 {strides = array<i32>} : memref<2x8x32xf32, #tpu.memory_space<vmem>>, vector<2x8x32xf32>,
    return
  }
  func.func @transform_0(%arg0: i32, %arg1: i32) -> (i32, i32, i32) {
    %c0_i32 = arith.constant 0 : i32
    %c0_i32_0 = arith.constant 0 : i32
    %c0_i32_1 = arith.constant 0 : i32
    return %arg0, %c0_i32, %c0_i32_0 : i32, i32, i32
  }
  func.func @transform_1(%arg0: i32, %arg1: i32) -> (i32, i32, i32) {
    %c0_i32 = arith.constant 0 : i32
    %c0_i32_0 = arith.constant 0 : i32
    %c0_i32_1 = arith.constant 0 : i32
    return %arg0, %c0_i32, %c0_i32_0 : i32, i32, i32
  }
  func.func @transform_2(%arg0: i32, %arg1: i32) -> (i32, i32, i32) {
    %c0_i32 = arith.constant 0 : i32
    %c0_i32_0 = arith.constant 0 : i32
    return %arg0, %arg1, %c0_i32 : i32, i32, i32
  }
  func.func @transform_3(%arg0: i32, %arg1: i32) -> (i32, i32, i32) {
    %c0_i32 = arith.constant 0 : i32
    %c0_i32_0 = arith.constant 0 : i32
    return %arg0, %arg1, %c0_i32 : i32, i32, i32
  }
}

</mosaic_0001>

<llo_original>
// kernel: tpu_custom_call.1
$region0: #{tpu_custom_call.1}
  #allocation0 [shape = 'u32[]', space=smem, size = 0x4, offset = 0x4, fixed_abs, tag = 'smem constant byte address 0x4 - core index']
  #allocation1 [shape = 'u32[72,128]{1,0:T(1,128)}', space=vmem, size = 0x9000, scoped, tag = 'internal scratch']
  %s0 = inlined_call_operand.hbm [shape: f32[2,8,32], index: 0, kind: input, shape index: {}]
  %s1 = inlined_call_operand.hbm [shape: f32[2,8,32], index: 1, kind: input, shape index: {}]
  %s2 = inlined_call_operand.hbm [shape: f32[2,8,32], index: 2, kind: input, shape index: {}]
  %s3 = inlined_call_operand.hbm [shape: f32[2,8,32], index: 3, kind: output, shape index: {}]
  %s4 = sld [smem:[#allocation0]]
  $region34: #{tpu_custom_call.1} parent=0
    _
  %s6 = ssub.s32 1, %s4
  %s7 = scalar_select 0, %s6, %s4
  $region1: #{tpu_custom_call.1} parent=0
    #allocation2 [shape = 'u8[8192]{0}', space=vmem, size = 0x2000, scoped, tag = 'input window, operand 0, single buffered']
    #allocation3 [shape = 's32[1]{0}', space=sflag, size = 0x4, scoped, tag = 'scoped memory for tpu_custom_call.1']
    #allocation4 [shape = 's32[1]{0}', space=sflag, size = 0x4, scoped, tag = 'scoped memory for tpu_custom_call.1']
    #allocation5 [shape = 'u8[8192]{0}', space=vmem, size = 0x2000, scoped, tag = 'input window, operand 1, single buffered']
    #allocation6 [shape = 's32[1]{0}', space=sflag, size = 0x4, scoped, tag = 'scoped memory for tpu_custom_call.1']
    #allocation7 [shape = 'u8[8192]{0}', space=vmem, size = 0x2000, scoped, tag = 'input window, operand 2, single buffered']
    #allocation8 [shape = 'u8[8192]{0}', space=vmem, size = 0x2000, scoped, tag = 'output window, operand 0, single buffered']
    %8 = vsyncpa [#allocation3], 0
    %9 = vsyncpa [#allocation6], 0
    %10 = vsyncpa [#allocation4], 0
    // Predicated region
    $region2: #{tpu_custom_call.1} parent=1 // pred_check
      _
    $region3: #{tpu_custom_call.1} parent=1 // pred_check_branch
      %12 = sbr.rel (0) target = $region5
    $region4: #{tpu_custom_call.1} parent=1 // pred_region
      %14 = vsyncadd [#allocation3], 0
      %s15 = sshll.u32 %s0, 4
      %s16 = int_to_ptr.hbm [resolvable:$true] %s15
      %s17 = sshll.u32 [#allocation2], 4
      %s18 = int_to_ptr.vmem [resolvable:$true] %s17
      %23 = dma.hbm_to_vmem [thread:$0]  %s16, 256, %s18, [#allocation3], 128, 128, 8
    $region5: #{tpu_custom_call.1} parent=1 // pred_fallthru
      _
    // Predicated region
    $region6: #{tpu_custom_call.1} parent=1 // pred_check
      _
    $region7: #{tpu_custom_call.1} parent=1 // pred_check_branch
      %25 = sbr.rel (0) target = $region9
    $region8: #{tpu_custom_call.1} parent=1 // pred_region
      %27 = vsyncadd [#allocation6], 0
      %s28 = sshll.u32 %s1, 4
      %s29 = int_to_ptr.hbm [resolvable:$true] %s28
      %s30 = sshll.u32 [#allocation5], 4
      %s31 = int_to_ptr.vmem [resolvable:$true] %s30
      %36 = dma.hbm_to_vmem [thread:$0]  %s29, 256, %s31, [#allocation6], 128, 128, 8
    $region9: #{tpu_custom_call.1} parent=1 // pred_fallthru
      _
    // Predicated region
    $region10: #{tpu_custom_call.1} parent=1 // pred_check
      _
    $region11: #{tpu_custom_call.1} parent=1 // pred_check_branch
      %38 = sbr.rel (0) target = $region13
    $region12: #{tpu_custom_call.1} parent=1 // pred_region
      %40 = vsyncadd [#allocation6], 0
      %s41 = sshll.u32 %s2, 4
      %s42 = int_to_ptr.hbm [resolvable:$true] %s41
      %s43 = sshll.u32 [#allocation7], 4
      %s44 = int_to_ptr.vmem [resolvable:$true] %s43
      %49 = dma.hbm_to_vmem [thread:$0]  %s42, 256, %s44, [#allocation6], 128, 128, 8
    $region13: #{tpu_custom_call.1} parent=1 // pred_fallthru
      _
    // Predicated region
    $region14: #{tpu_custom_call.1} parent=1 // pred_check
      _
    $region15: #{tpu_custom_call.1} parent=1 // pred_check_branch
      %51 = sbr.rel (0) target = $region17
    $region16: #{tpu_custom_call.1} parent=1 // pred_region
      %53 = dma.done [#allocation3], 256
    $region17: #{tpu_custom_call.1} parent=1 // pred_fallthru
      _
    // Predicated region
    $region18: #{tpu_custom_call.1} parent=1 // pred_check
      _
    $region19: #{tpu_custom_call.1} parent=1 // pred_check_branch
      %55 = sbr.rel (0) target = $region21
    $region20: #{tpu_custom_call.1} parent=1 // pred_region
      %57 = dma.done [#allocation6], 256
    $region21: #{tpu_custom_call.1} parent=1 // pred_fallthru
      _
    // Predicated region
    $region22: #{tpu_custom_call.1} parent=1 // pred_check
      _
    $region23: #{tpu_custom_call.1} parent=1 // pred_check_branch
      %59 = sbr.rel (0) target = $region25
    $region24: #{tpu_custom_call.1} parent=1 // pred_region
      %61 = dma.done [#allocation6], 256
    $region25: #{tpu_custom_call.1} parent=1 // pred_fallthru
      _
    %v62 = vld [vmem:[#allocation2] sm:$0xff]
    %v63 = vld [vmem:[#allocation2 + $0x8] sm:$0xff]
    %v64 = vld [vmem:[#allocation5] sm:$0xff]
    %v65 = vld [vmem:[#allocation5 + $0x8] sm:$0xff]
    %v66 = vld [vmem:[#allocation7] sm:$0xff]
    %v67 = vld [vmem:[#allocation7 + $0x8] sm:$0xff]
    %vm68 = vcmask 261120
    %v70 = vsel %vm68, %v66, 0
    %v73 = vsel %vm68, %v62, 0
    %75 = vmatpush.xpose.msra.mxu0 0.0
    %76 = vmatpush.xpose.msra.mxu0 0.0
    %77 = vmatpush.xpose.msra.mxu0 0.0
    %78 = vmatpush.xpose.msra.mxu0 0.0
    %79 = vmatpush.xpose.msra.mxu0 0.0
    %80 = vmatpush.xpose.msra.mxu0 0.0
    %81 = vmatpush.xpose.msra.mxu0 0.0
    %82 = vmatpush.xpose.msra.mxu0 0.0
    %83 = vmatpush.xpose.msra.mxu0 0.0
    %84 = vmatpush.xpose.msra.mxu0 0.0
    %85 = vmatpush.xpose.msra.mxu0 0.0
    %86 = vmatpush.xpose.msra.mxu0 0.0
    %87 = vmatpush.xpose.msra.mxu0 0.0
    %88 = vmatpush.xpose.msra.mxu0 0.0
    %89 = vmatpush.xpose.msra.mxu0 0.0
    %90 = vmatpush.xpose.msra.mxu0 %v73
    %91 = vmatmul.f32.gmra.mxu0 %v70
    %v92 = vpop.f32.mrf.mxu0
    %v93 = vadd.f32 0.0, %v92
    %94 = vdwg.mxu0
    %v96 = vsel %vm68, %v67, 0
    %v99 = vsel %vm68, %v63, 0
    %101 = vmatpush.xpose.msra.mxu0 0.0
    %102 = vmatpush.xpose.msra.mxu0 0.0
    %103 = vmatpush.xpose.msra.mxu0 0.0
    %104 = vmatpush.xpose.msra.mxu0 0.0
    %105 = vmatpush.xpose.msra.mxu0 0.0
    %106 = vmatpush.xpose.msra.mxu0 0.0
    %107 = vmatpush.xpose.msra.mxu0 0.0
    %108 = vmatpush.xpose.msra.mxu0 0.0
    %109 = vmatpush.xpose.msra.mxu0 0.0
    %110 = vmatpush.xpose.msra.mxu0 0.0
    %111 = vmatpush.xpose.msra.mxu0 0.0
    %112 = vmatpush.xpose.msra.mxu0 0.0
    %113 = vmatpush.xpose.msra.mxu0 0.0
    %114 = vmatpush.xpose.msra.mxu0 0.0
    %115 = vmatpush.xpose.msra.mxu0 0.0
    %116 = vmatpush.xpose.msra.mxu0 %v99
    %117 = vmatmul.f32.gmra.mxu0 %v96
    %v118 = vpop.f32.mrf.mxu0
    %v119 = vadd.f32 0.0, %v118
    %120 = vdwg.mxu0
    %vm121 = vcmask 64512
    %v122 = vsel %vm121, %v93, -inf
    %123 = vmax.xlane.f32.xlu0 %v122
    %v124 = vpop.xlane.xlu0 %123
    %v125 = vsel %vm121, %v119, -inf
    %126 = vmax.xlane.f32.xlu0 %v125
    %v127 = vpop.xlane.xlu0 %126
    %v128 = vsub.f32 %v93, %v124
    %v129 = vsub.f32 %v119, %v127
    %v130 = vmul.f32 %v128, 1.442695
    %v131 = vpow.pop %v130
    %v132 = vmul.f32 %v129, 1.442695
    %v133 = vpow.pop %v132
    %v134 = vsel %vm121, %v131, 0.0
    %135 = vadd.xlane.f32.xlu0 %v134
    %v136 = vpop.xlane.xlu0 %135
    %v137 = vsel %vm121, %v133, 0.0
    %138 = vadd.xlane.f32.xlu0 %v137
    %v139 = vpop.xlane.xlu0 %138
    %v140 = vrcp.pop %v136
    %v141 = vmul.f32 %v136, %v140
    %v142 = vsub.f32 1.0, %v141
    %v143 = vmul.f32 %v140, %v142
    %v144 = vadd.f32 %v140, %v143
    %vm145 = vweird.f32 %v136
    %vm146 = vweird.f32 %v140
    %vm147 = vmor %vm145, %vm146
    %v148 = vsel %vm147, %v140, %v144
    %v149 = vand.u32 2147483647, %v136
    %vm150 = vcmp.eq.f32.partialorder %v149, 8.507059e+37
    %v151 = vand.u32 %v136, 2147483648
    %v152 = vor.u32 1.1754944e-38, %v151
    %v153 = vsel %vm150, %v152, %v148
    %v154 = vrcp.pop %v139
    %v155 = vmul.f32 %v139, %v154
    %v156 = vsub.f32 1.0, %v155
    %v157 = vmul.f32 %v154, %v156
    %v158 = vadd.f32 %v154, %v157
    %vm159 = vweird.f32 %v139
    %vm160 = vweird.f32 %v154
    %vm161 = vmor %vm159, %vm160
    %v162 = vsel %vm161, %v154, %v158
    %v163 = vand.u32 2147483647, %v139
    %vm164 = vcmp.eq.f32.partialorder %v163, 8.507059e+37
    %v165 = vand.u32 %v139, 2147483648
    %v166 = vor.u32 1.1754944e-38, %v165
    %v167 = vsel %vm164, %v166, %v162
    %v168 = vmul.f32 %v131, %v153
    %v169 = vmul.f32 %v133, %v167
    %v171 = vsel %vm121, %v168, 0
    %173 = vmatpush.msra.mxu0 0.0
    %174 = vmatpush.msra.mxu0 0.0
    %175 = vmatpush.msra.mxu0 0.0
    %176 = vmatpush.msra.mxu0 0.0
    %177 = vmatpush.msra.mxu0 0.0
    %178 = vmatpush.msra.mxu0 0.0
    %179 = vmatpush.msra.mxu0 0.0
    %180 = vmatpush.msra.mxu0 0.0
    %181 = vmatpush.msra.mxu0 0.0
    %182 = vmatpush.msra.mxu0 0.0
    %183 = vmatpush.msra.mxu0 0.0
    %184 = vmatpush.msra.mxu0 0.0
    %185 = vmatpush.msra.mxu0 0.0
    %186 = vmatpush.msra.mxu0 0.0
    %187 = vmatpush.msra.mxu0 0.0
    %188 = vmatpush.msra.mxu0 %v64
    %189 = vmatmul.f32.gmra.mxu0 %v171
    %v190 = vpop.f32.mrf.mxu0
    %v191 = vadd.f32 0.0, %v190
    %192 = vdwg.mxu0
    %v194 = vsel %vm121, %v169, 0
    %196 = vmatpush.msra.mxu0 0.0
    %197 = vmatpush.msra.mxu0 0.0
    %198 = vmatpush.msra.mxu0 0.0
    %199 = vmatpush.msra.mxu0 0.0
    %200 = vmatpush.msra.mxu0 0.0
    %201 = vmatpush.msra.mxu0 0.0
    %202 = vmatpush.msra.mxu0 0.0
    %203 = vmatpush.msra.mxu0 0.0
    %204 = vmatpush.msra.mxu0 0.0
    %205 = vmatpush.msra.mxu0 0.0
    %206 = vmatpush.msra.mxu0 0.0
    %207 = vmatpush.msra.mxu0 0.0
    %208 = vmatpush.msra.mxu0 0.0
    %209 = vmatpush.msra.mxu0 0.0
    %210 = vmatpush.msra.mxu0 0.0
    %211 = vmatpush.msra.mxu0 %v65
    %212 = vmatmul.f32.gmra.mxu0 %v194
    %v213 = vpop.f32.mrf.mxu0
    %v214 = vadd.f32 0.0, %v213
    %215 = vdwg.mxu0
    %216 = vst.msk [vmem:[#allocation8] sm:$0xff] %vm68, %v191
    %217 = vst.msk [vmem:[#allocation8 + $0x8] sm:$0xff] %vm68, %v214
    // Predicated region
    $region26: #{tpu_custom_call.1} parent=1 // pred_check
      _
    $region27: #{tpu_custom_call.1} parent=1 // pred_check_branch
      %219 = sbr.rel (0) target = $region29
    $region28: #{tpu_custom_call.1} parent=1 // pred_region
      %221 = vsyncadd [#allocation4], 0
      %s222 = sshll.u32 [#allocation8], 4
      %s223 = int_to_ptr.vmem [resolvable:$true] %s222
      %s224 = sshll.u32 %s3, 4
      %s225 = int_to_ptr.hbm [resolvable:$true] %s224
      %230 = dma.vmem_to_hbm [thread:$0]  %s223, 256, %s225, [#allocation4], 128, 128, 8
    $region29: #{tpu_custom_call.1} parent=1 // pred_fallthru
      _
    // Predicated region
    $region30: #{tpu_custom_call.1} parent=1 // pred_check
      _
    $region31: #{tpu_custom_call.1} parent=1 // pred_check_branch
      %232 = sbr.rel (0) target = $region33
    $region32: #{tpu_custom_call.1} parent=1 // pred_region
      %234 = dma.done [#allocation4], 256
    $region33: #{tpu_custom_call.1} parent=1 // pred_fallthru
      _
    %235 = vsyncpa [#allocation3], 1
    %236 = vsyncpa [#allocation6], 1
    %237 = vsyncpa [#allocation4], 1

</llo_original>
